<compile_context>
chip_gen: v6e
topology: v6e:2x2x1
jax: 0.10.0
libtpu: 0.0.40
codegen_flags: <defaults>
</compile_context>

<pallas_src>
import functools

import jax
import jax.numpy as jnp
from jax import lax
from jax.experimental import pallas as pl
from jax.experimental.pallas import tpu as pltpu


# parity -> kernel tap indices (ky or kx) touching that parity, in the fixed order
# shared by the host-side weight stacking and the in-kernel shift tables.
_TAPS_FOR_PARITY = {1: (0, 2), 0: (1, 3)}
# down conv source-row offset dyp = (ky - 1 - qy)//2 for ky in _TAPS_FOR_PARITY[qy]
_DOWN_SHIFT = {1: (-1, 0), 0: (0, 1)}
# transposed conv source-row offset dy = (py + 1 - ky)//2 for ky in _TAPS_FOR_PARITY[py]
_UP_SHIFT = {1: (1, 0), 0: (0, -1)}


# ----------------------------------------------------------------- pltpu.roll probe
def _roll_probe_kernel(x_ref, o_ref):
    o_ref[...] = pltpu.roll(x_ref[...], 1, axis=1)


@functools.lru_cache(maxsize=None)
def _roll_matches_numpy():
    """Tiny one-off kernel detecting pltpu.roll's rotation direction so the fused
    kernel's tap shifts are correct under either sign convention."""
    x = jnp.broadcast_to(jnp.arange(128, dtype=jnp.float32), (8, 128))
    out = pl.pallas_call(
        _roll_probe_kernel,
        out_shape=jax.ShapeDtypeStruct((8, 128), jnp.float32),
    )(x)
    # np.roll convention: each row becomes [127, 0, 1, ...].
    return bool(out[0, 0] == 127.0)


# ------------------------------------------------------------------ the fused kernel
def _unet_fused_kernel(xph_ref, wd_ref, wu_ref, gamma_ref, beta_ref, out_ref, *,
                       h2, w2, ni_pad, co_pad, n_pix_total, roll_numpy):
    """Everything VMEM-resident; the pixel axis (n, m, j) is the 128-wide lane axis.

    xph_ref:   [4, c_pad, P]       f32   phase-split input, q=qy*2+qx, x[n,ci,2m+qy,2j+qx]
    wd_ref:    [4, 4*ni_pad, c_pad] bf16 down-conv taps stacked per INPUT phase
    wu_ref:    [4, 4*co_pad, ni_pad] bf16 convT taps stacked per OUTPUT phase
    gamma/beta:[co_pad, 1]         f32   BatchNorm affine params (padded)
    out_ref:   [4, co_pad, P]      f32   4 output phases (py*2+px, co, pixel)
    """
    npix = out_ref.shape[-1]

    # ---- boundary masks from a single in-kernel [1, P] lane iota (hoisted) --------
    lane = lax.broadcasted_iota(jnp.int32, (1, npix), 1)
    hw = h2 * w2
    if (w2 & (w2 - 1)) == 0 and (hw & (hw - 1)) == 0:
        mj_row = jnp.bitwise_and(lane, hw - 1)        # m*w2 + j   (pow2 fast path)
        j_row = jnp.bitwise_and(lane, w2 - 1)         # j
    else:
        mj_row = lane % hw                            # general path (vector i32 rem)
        j_row = lane % w2
    pred_y = {-1: mj_row >= w2, 0: None, 1: mj_row < (h2 - 1) * w2}   # m>=1 / m<=h2-2
    pred_x = {-1: j_row >= 1, 0: None, 1: j_row <= w2 - 2}
    masks = {}
    for dy in (-1, 0, 1):
        for dx in (-1, 0, 1):
            if dy == 0 and dx == 0:
                continue
            a, b = pred_y[dy], pred_x[dx]
            masks[(dy, dx)] = a if b is None else (b if a is None else
                                                   jnp.logical_and(a, b))

    def tap_shift(v, dy, dx):
        """Bring source lane L + dy*w2 + dx to lane L; zero out-of-range (pad) taps."""
        s = dy * w2 + dx
        if s == 0:
            return v
        amt = (-s) % npix if roll_numpy else s % npix
        v = pltpu.roll(v, amt, axis=1)                # XLU lane rotate (free slot)
        return jnp.where(masks[(dy, dx)], v, 0.0)     # [1,P] mask broadcast over rows

    # ---- down path: LeakyReLU(0.2) + Conv2d(k=4, s=2, p=1), phase-decomposed ------
    d = jnp.zeros((ni_pad, npix), jnp.float32)
    for q in range(4):                                # input phase q = (qy, qx)
        qy, qx = q // 2, q % 2
        v = xph_ref[q]                                # [c_pad, P] f32
        v = jnp.where(v >= 0.0, v, 0.2 * v)           # LeakyReLU once per element
        v = v.astype(jnp.bfloat16)
        taps = jnp.dot(wd_ref[q], v, preferred_element_type=jnp.float32)  # [4*ni_pad,P]
        for iy, dyp in enumerate(_DOWN_SHIFT[qy]):
            for ix, dxp in enumerate(_DOWN_SHIFT[qx]):
                t = iy * 2 + ix
                d = d + tap_shift(taps[t * ni_pad:(t + 1) * ni_pad, :], dyp, dxp)

    # ---- up path: ReLU + ConvTranspose2d(k=4, s=2, p=1), one matmul per phase ------
    r = jnp.maximum(d, 0.0).astype(jnp.bfloat16)      # [ni_pad, P]
    s1 = jnp.zeros((co_pad, 1), jnp.float32)          # BN sum
    s2 = jnp.zeros((co_pad, 1), jnp.float32)          # BN sum of squares
    for ph in range(4):                               # output phase ph = (py, px)
        py, px = ph // 2, ph % 2
        taps = jnp.dot(wu_ref[ph], r, preferred_element_type=jnp.float32)  # [4*co_pad,P]
        acc = jnp.zeros((co_pad, npix), jnp.float32)
        for iy, dy in enumerate(_UP_SHIFT[py]):
            for ix, dx in enumerate(_UP_SHIFT[px]):
                t = iy * 2 + ix
                acc = acc + tap_shift(taps[t * co_pad:(t + 1) * co_pad, :], dy, dx)
        s1 = s1 + acc.sum(axis=1, keepdims=True)
        s2 = s2 + jnp.square(acc).sum(axis=1, keepdims=True)
        out_ref[ph] = acc                             # unnormalized; rescaled below

    # ---- BatchNorm2d (training batch stats, biased var, eps=1e-5), single pass -----
    inv_n = 1.0 / n_pix_total
    mean = s1 * inv_n
    var = jnp.maximum(s2 * inv_n - jnp.square(mean), 0.0)
    scale = gamma_ref[...] * lax.rsqrt(var + 1e-5)    # [co_pad, 1]
    offs = beta_ref[...] - mean * scale
    scale_b = jnp.broadcast_to(scale, (co_pad, npix)) # hoisted lane broadcasts
    offs_b = jnp.broadcast_to(offs, (co_pad, npix))
    for ph in range(4):
        out_ref[ph] = out_ref[ph] * scale_b + offs_b  # lane-dense vst


# ------------------------------------------------------------------------------ glue
def _phase_split_input(x, h2, w2, c_pad):
    """x[N,C,H,W] -> [4, c_pad, N*h2*w2] f32 with value x[n, ci, 2m+qy, 2j+qx]."""
    n, c, _, _ = x.shape
    xr = x.reshape(n, c, h2, 2, w2, 2)                # [n, c, m, qy, j, qx]
    xr = xr.transpose(3, 5, 1, 0, 2, 4)               # [qy, qx, c, n, m, j]
    xr = xr.reshape(4, c, n * h2 * w2)
    if c_pad > c:
        xr = jnp.pad(xr, ((0, 0), (0, c_pad - c), (0, 0)))
    return xr


def _stack_down_weights(w_down, ni_pad, c_pad):
    """w_down [ni, C, 4, 4] -> [4, 4*ni_pad, c_pad] bf16, taps stacked per input phase."""
    ni, c = w_down.shape[0], w_down.shape[1]
    blocks = []
    for q in range(4):
        qy, qx = q // 2, q % 2
        taps = []
        for ky in _TAPS_FOR_PARITY[qy]:
            for kx in _TAPS_FOR_PARITY[qx]:
                wt = jnp.pad(w_down[:, :, ky, kx], ((0, ni_pad - ni), (0, c_pad - c)))
                taps.append(wt)
        blocks.append(jnp.concatenate(taps, axis=0))
    return jnp.stack(blocks, axis=0).astype(jnp.bfloat16)


def _stack_up_weights(w_up, ni_pad, co_pad):
    """w_up (ConvT) [ni, nf, 4, 4] -> [4, 4*co_pad, ni_pad] bf16, per output phase."""
    ni, nf = w_up.shape[0], w_up.shape[1]
    blocks = []
    for ph in range(4):
        py, px = ph // 2, ph % 2
        taps = []
        for ky in _TAPS_FOR_PARITY[py]:
            for kx in _TAPS_FOR_PARITY[px]:
                wt = jnp.pad(w_up[:, :, ky, kx].T, ((0, co_pad - nf), (0, ni_pad - ni)))
                taps.append(wt)                       # [co, ci]
        blocks.append(jnp.concatenate(taps, axis=0))
    return jnp.stack(blocks, axis=0).astype(jnp.bfloat16)


@functools.partial(jax.jit, static_argnums=(5,))
def _forward_impl(x, w_down, w_up, gamma, beta, roll_numpy):
    n, c, h, w = x.shape
    ni = w_down.shape[0]
    nf = w_up.shape[1]
    h2, w2 = h // 2, w // 2
    npix = n * h2 * w2                                # pixels per phase == lane width
    c_pad = ((c + 7) // 8) * 8
    ni_pad = ((ni + 7) // 8) * 8
    co_pad = ((nf + 7) // 8) * 8

    x = x.astype(jnp.float32)

    # layout-only preprocessing (weight restacking is a one-off in a real model)
    xph = _phase_split_input(x, h2, w2, c_pad)                          # [4,c_pad,P] f32
    wd = _stack_down_weights(w_down.astype(jnp.float32), ni_pad, c_pad)
    wu = _stack_up_weights(w_up.astype(jnp.float32), ni_pad, co_pad)
    g = jnp.pad(gamma.reshape(-1).astype(jnp.float32), (0, co_pad - nf)).reshape(co_pad, 1)
    b = jnp.pad(beta.reshape(-1).astype(jnp.float32), (0, co_pad - nf)).reshape(co_pad, 1)

    kernel = functools.partial(
        _unet_fused_kernel, h2=h2, w2=w2, ni_pad=ni_pad, co_pad=co_pad,
        n_pix_total=n * h * w, roll_numpy=roll_numpy)

    # size the scoped VMEM budget from the actual chip (v7x: 64 MiB, v5e/v6e: 128 MiB)
    try:
        vmem_limit = min(int(pltpu.get_tpu_info().vmem_capacity_bytes) * 3 // 4,
                         96 * 1024 * 1024)
    except Exception:
        vmem_limit = 32 * 1024 * 1024

    vmem = pltpu.MemorySpace.VMEM
    u_ph = pl.pallas_call(
        kernel,
        out_shape=jax.ShapeDtypeStruct((4, co_pad, npix), jnp.float32),
        in_specs=[pl.BlockSpec(memory_space=vmem) for _ in range(5)],
        out_specs=pl.BlockSpec(memory_space=vmem),
        compiler_params=pltpu.CompilerParams(vmem_limit_bytes=vmem_limit),
    )(xph, wd, wu, g, b)

    # layout-only postprocessing: interleave the 4 ConvT phases back to NCHW + skip cat
    u = u_ph[:, :nf, :].reshape(2, 2, nf, n, h2, w2)  # [py, px, co, n, m, j]
    u = u.transpose(3, 2, 4, 0, 5, 1).reshape(n, nf, h, w)
    return jnp.concatenate([x, u], axis=1)


def unet_block_innermost_forward(x, w_down, w_up, gamma, beta):
    """x: [N, C, H, W] NCHW. w_down: [ni, C, 4, 4]. w_up (ConvT): [ni, nf, 4, 4]."""
    return _forward_impl(x, w_down, w_up, gamma, beta, _roll_matches_numpy())


# ----------------------------------------------------------------------- pure-JAX ref
def reference_forward(x, w_down, w_up, gamma, beta):
    y = jnp.where(x >= 0, x, 0.2 * x)
    d = lax.conv_general_dilated(y, w_down, (2, 2), [(1, 1), (1, 1)],
                                 dimension_numbers=("NCHW", "OIHW", "NCHW"))
    r = jnp.maximum(d, 0.0)
    w_eq = jnp.transpose(w_up, (1, 0, 2, 3))[:, :, ::-1, ::-1]           # [nf, ni, 4, 4]
    u = lax.conv_general_dilated(r, w_eq, (1, 1), [(2, 2), (2, 2)],
                                 lhs_dilation=(2, 2),
                                 dimension_numbers=("NCHW", "OIHW", "NCHW"))
    mean = jnp.mean(u, axis=(0, 2, 3), keepdims=True)
    var = jnp.mean(jnp.square(u - mean), axis=(0, 2, 3), keepdims=True)
    g = gamma.reshape(1, -1, 1, 1)
    b = beta.reshape(1, -1, 1, 1)
    u_bn = (u - mean) * lax.rsqrt(var + 1e-5) * g + b
    return jnp.concatenate([x, u_bn], axis=1)


if __name__ == "__main__":
    # UnetBlock(nf=4, ni=8, innermost=True); input_c defaults to nf.
    nf, ni = 4, 8
    N, H, W = 2, 16, 16

    key = jax.random.PRNGKey(0)
    k_x, k_wd, k_wu, k_g, k_b = jax.random.split(key, 5)
    x = jax.random.normal(k_x, (N, nf, H, W), jnp.float32)
    w_down = 0.05 * jax.random.normal(k_wd, (ni, nf, 4, 4), jnp.float32)  # Conv2d(nf->ni)
    w_up = 0.05 * jax.random.normal(k_wu, (ni, nf, 4, 4), jnp.float32)    # ConvT(ni->nf)
    gamma = 1.0 + 0.1 * jax.random.normal(k_g, (nf,), jnp.float32)        # BN affine
    beta = 0.1 * jax.random.normal(k_b, (nf,), jnp.float32)

    out = jax.block_until_ready(
        unet_block_innermost_forward(x, w_down, w_up, gamma, beta))
    ref = reference_forward(x, w_down, w_up, gamma, beta)

    assert out.shape == (N, 2 * nf, H, W), out.shape
    max_err = float(jnp.max(jnp.abs(out - ref)))
    # bf16 MXU operands vs. the all-f32 reference -> ~1e-2-scale error on the
    # unit-variance BatchNorm output; 3e-2 still catches any real indexing/phase bug.
    assert jnp.allclose(out, ref, atol=3e-2, rtol=3e-2), max_err
    print("KERNEL_OK")
</pallas_src>

<mosaic_0001>
module attributes {stable_mosaic.version = 11 : i64} {
  func.func @_roll_probe_kernel(%arg0: memref<8x128xf32, #tpu.memory_space<vmem>>, %arg1: memref<8x128xf32, #tpu.memory_space<vmem>>) attributes {dimension_semantics = [], scalar_prefetch = 0 : i64, scratch_operands = 0 : i64, tpu.core_type = #tpu.core_type<tc>} {
    %c0 = arith.constant 0 : index
    %c0_0 = arith.constant 0 : index
    %0 = vector.load %arg0[%c0, %c0_0] : memref<8x128xf32, #tpu.memory_space<vmem>>, vector<8x128xf32>
    %c1_i32 = arith.constant 1 : i32
    %1 = tpu.dynamic_rotate %0 by %c1_i32 dim 1 : vector<8x128xf32>, i32 -> vector<8x128xf32>
    %c0_1 = arith.constant 0 : index
    %c0_2 = arith.constant 0 : index
    %2 = vector.load %arg1[%c0_1, %c0_2] : memref<8x128xf32, #tpu.memory_space<vmem>>, vector<8x128xf32>
    tpu.vector_store %arg1[%c0_1, %c0_2], %1 {strides = array<i32>} : memref<8x128xf32, #tpu.memory_space<vmem>>, vector<8x128xf32>,
    return
  }
}

</mosaic_0001>

<llo_original>
// kernel: tpu_custom_call.1
$region0: #{tpu_custom_call.1}
  #allocation0 [shape = 'u32[]', space=smem, size = 0x4, offset = 0x4, fixed_abs, tag = 'smem constant byte address 0x4 - core index']
  #allocation1 [shape = 'u32[144,128]{1,0:T(1,128)}', space=vmem, size = 0x12000, scoped, tag = 'internal scratch']
  %s0 = inlined_call_operand.hbm [shape: f32[8,128], index: 0, kind: input, shape index: {}]
  %s1 = inlined_call_operand.hbm [shape: f32[8,128], index: 1, kind: output, shape index: {}]
  %s2 = sld [smem:[#allocation0]]
  $region18: #{tpu_custom_call.1} parent=0
    _
  %s4 = ssub.s32 1, %s2
  %s5 = scalar_select 0, %s4, %s2
  $region1: #{tpu_custom_call.1} parent=0
    #allocation2 [shape = 'u8[4096]{0}', space=vmem, size = 0x1000, scoped, tag = 'input window, operand 0, single buffered']
    #allocation3 [shape = 's32[1]{0}', space=sflag, size = 0x4, scoped, tag = 'scoped memory for tpu_custom_call.1']
    #allocation4 [shape = 's32[1]{0}', space=sflag, size = 0x4, scoped, tag = 'scoped memory for tpu_custom_call.1']
    #allocation5 [shape = 'u8[4096]{0}', space=vmem, size = 0x1000, scoped, tag = 'output window, operand 0, single buffered']
    %6 = vsyncpa [#allocation3], 0
    %7 = vsyncpa [#allocation4], 0
    // Predicated region
    $region2: #{tpu_custom_call.1} parent=1 // pred_check
      _
    $region3: #{tpu_custom_call.1} parent=1 // pred_check_branch
      %9 = sbr.rel (0) target = $region5
    $region4: #{tpu_custom_call.1} parent=1 // pred_region
      %s11 = ssub.s32 128, 128
      %12 = vsyncadd [#allocation3], %s11
      %s14 = sshll.u32 [#allocation2], 4
      %s15 = int_to_ptr.vmem [resolvable:$true] %s14
      %17 = dma.hbm_to_vmem [thread:$0]  %s0, 128, %s15, [#allocation3]
    $region5: #{tpu_custom_call.1} parent=1 // pred_fallthru
      _
    // Predicated region
    $region6: #{tpu_custom_call.1} parent=1 // pred_check
      _
    $region7: #{tpu_custom_call.1} parent=1 // pred_check_branch
      %19 = sbr.rel (0) target = $region9
    $region8: #{tpu_custom_call.1} parent=1 // pred_region
      %20 = dma.done [#allocation3], 128
    $region9: #{tpu_custom_call.1} parent=1 // pred_fallthru
      _
    %v21 = vld [vmem:[#allocation2] sm:$0xff]
    %22 = vrot.lane.b32.xlu0 %v21, 1
    %v23 = vpop.permute.xlu0 %22
    %24 = vst [vmem:[#allocation5] sm:$0xff] %v23
    // Predicated region
    $region10: #{tpu_custom_call.1} parent=1 // pred_check
      _
    $region11: #{tpu_custom_call.1} parent=1 // pred_check_branch
      %26 = sbr.rel (0) target = $region13
    $region12: #{tpu_custom_call.1} parent=1 // pred_region
      %s28 = ssub.s32 128, 128
      %29 = vsyncadd [#allocation4], %s28
      %s31 = sshll.u32 [#allocation5], 4
      %s32 = int_to_ptr.vmem [resolvable:$true] %s31
      %34 = dma.vmem_to_hbm [thread:$0]  %s32, 128, %s1, [#allocation4]
    $region13: #{tpu_custom_call.1} parent=1 // pred_fallthru
      _
    // Predicated region
    $region14: #{tpu_custom_call.1} parent=1 // pred_check
      _
    $region15: #{tpu_custom_call.1} parent=1 // pred_check_branch
      %36 = sbr.rel (0) target = $region17
    $region16: #{tpu_custom_call.1} parent=1 // pred_region
      %37 = dma.done [#allocation4], 128
    $region17: #{tpu_custom_call.1} parent=1 // pred_fallthru
      _
    %38 = vsyncpa [#allocation3], 1
    %39 = vsyncpa [#allocation4], 1

</llo_original>
